<compile_context>
chip_gen: v6e
topology: v6e:2x2x1
jax: 0.10.0
libtpu: 0.0.40
codegen_flags: <defaults>
</compile_context>

<pallas_src>
import jax
import jax.numpy as jnp
from jax.experimental import pallas as pl
from jax.experimental.pallas import tpu as pltpu


OUT_PAD = 8  # D_OUT=2 padded to 8 output columns (narrow, contiguous out block)


def combined_kernel(x_ref, w1_ref, b1_ref, wc_ref, bc_ref, out_ref):
    # Cast the f32 x tile to bf16 in-VMEM (VPU cast hides under the x DMA;
    # no extra HBM copy of x is materialized in the wrapper).
    x_bf = x_ref[...].astype(jnp.bfloat16)
    # classifier layer 1: Linear -> ReLU (bf16 operands, f32 accumulation)
    h1 = jnp.dot(x_bf, w1_ref[...], preferred_element_type=jnp.float32)
    h1 = jnp.maximum(h1 + b1_ref[...], 0.0)          # f32 elementwise (v5e-safe)
    # folded (Linear2 + bias + normalize + prober) as one bf16 matmul + f32 bias
    out = jnp.dot(h1.astype(jnp.bfloat16), wc_ref[...],
                  preferred_element_type=jnp.float32) + bc_ref[...]
    out_ref[...] = out.astype(out_ref.dtype)


def _choose_tm(n):
    """Batch tile: large enough to amortize ~0.35us/grid-step overhead, small
    enough that the f32 x double-buffer fits the 32 MiB scoped VMEM limit, and
    with an even number of grid steps so v7x's two TensorCores both get work."""
    if n < 16:
        return n                                    # tiny batch: one full-array block
    steps = max(2, pl.cdiv(n, 2048))                # cap tile at ~2048 rows (8 MiB f32)
    steps += steps % 2                              # even step count for 2 TCs (v7x)
    return ((pl.cdiv(n, steps) + 7) // 8) * 8       # sublane-aligned tile


def combined_nn(x_nchw, params):
    w1, b1, w2, b2, mean, std, wp, bp = params
    N = x_nchw.shape[0]
    x_flat = x_nchw.reshape(N, -1).astype(jnp.float32)   # flatten NCHW -> [N, C*H*W]
    D_IN, D_MID = w1.shape
    D_HIDDEN, D_OUT = wp.shape

    # ---- fold the frozen affine chain (once, at trace time) ----
    #   ((h1 @ w2 + b2 - mean) / std) @ wp + bp  ==  h1 @ Wc + bc
    # TODO(synk): add a guard if hidden_std could ever contain zeros (reference divides too).
    inv_std = 1.0 / std                                   # (1, D_HIDDEN)
    wc = w2 @ (wp * inv_std.T)                            # (D_MID, D_OUT)
    bc = ((b2 - mean) * inv_std) @ wp + bp                # (1, D_OUT)

    # ---- narrow, zero-padded output weights (8 columns, not 128) ----
    wc_p = jnp.zeros((D_MID, OUT_PAD), jnp.float32).at[:, :D_OUT].set(wc)
    bc_p = jnp.zeros((1, OUT_PAD), jnp.float32).at[:, :D_OUT].set(bc)
    wc_bf = wc_p.astype(jnp.bfloat16)     # bf16-native MXU path; halves Wc VMEM/DMA
    bc_f32 = bc_p.astype(jnp.float32)

    w1_bf = w1.astype(jnp.bfloat16)       # tiny, frozen weight: one-time cast is fine
    b1_f32 = b1.astype(jnp.float32)

    TM = _choose_tm(N)
    grid = (pl.cdiv(N, TM),)

    resident = dict(pipeline_mode=pl.Buffered(1))   # single-buffer constant-index weights

    out_padded = pl.pallas_call(
        combined_kernel,
        out_shape=jax.ShapeDtypeStruct((N, OUT_PAD), jnp.float32),
        grid=grid,
        in_specs=[
            pl.BlockSpec((TM, D_IN), lambda i: (i, 0)),                    # x tile (f32, pipelined)
            pl.BlockSpec((D_IN, D_MID), lambda i: (0, 0), **resident),     # w1 (resident)
            pl.BlockSpec((1, D_MID), lambda i: (0, 0), **resident),        # b1 (resident)
            pl.BlockSpec((D_MID, OUT_PAD), lambda i: (0, 0), **resident),  # folded Wc (resident)
            pl.BlockSpec((1, OUT_PAD), lambda i: (0, 0), **resident),      # folded bc (resident)
        ],
        out_specs=pl.BlockSpec((TM, OUT_PAD), lambda i: (i, 0)),
        compiler_params=pltpu.CompilerParams(
            dimension_semantics=("parallel",),     # v7x: 2 TCs split the batch steps
            vmem_limit_bytes=32 * 1024 * 1024,     # safe on v5e/v6e/v7x
        ),
    )(x_flat, w1_bf, b1_f32, wc_bf, bc_f32)

    return out_padded[:, :D_OUT]   # trivial 8-byte/row slice


def reference(x_nchw, params):
    # Full-precision reference of the original (un-folded) forward.
    w1, b1, w2, b2, mean, std, wp, bp = params
    x = x_nchw.reshape(x_nchw.shape[0], -1)
    h1 = jnp.maximum(x @ w1 + b1, 0.0)
    hidden = (h1 @ w2 + b2 - mean) / std
    return hidden @ wp + bp


if __name__ == "__main__":
    # small shapes consistent with the forward pass
    N, C, H, W = 2, 4, 16, 16
    D_IN = C * H * W          # 1024
    D_MID = 64
    D_HIDDEN = 32
    D_OUT = 2

    key = jax.random.PRNGKey(0)
    ks = jax.random.split(key, 9)

    x = jax.random.normal(ks[0], (N, C, H, W), dtype=jnp.float32)

    # deterministic "frozen" parameters
    w1 = jax.random.normal(ks[1], (D_IN, D_MID), dtype=jnp.float32) * 0.02
    b1 = jax.random.normal(ks[2], (1, D_MID), dtype=jnp.float32) * 0.01
    w2 = jax.random.normal(ks[3], (D_MID, D_HIDDEN), dtype=jnp.float32) * 0.05
    b2 = jax.random.normal(ks[4], (1, D_HIDDEN), dtype=jnp.float32) * 0.01
    hidden_mean = jax.random.normal(ks[5], (1, D_HIDDEN), dtype=jnp.float32) * 0.1
    hidden_std = jax.random.uniform(ks[6], (1, D_HIDDEN), dtype=jnp.float32,
                                    minval=0.5, maxval=1.5)
    wp = jax.random.normal(ks[7], (D_HIDDEN, D_OUT), dtype=jnp.float32) * 0.1
    bp = jax.random.normal(ks[8], (1, D_OUT), dtype=jnp.float32) * 0.01

    params = (w1, b1, w2, b2, hidden_mean, hidden_std, wp, bp)

    out = jax.block_until_ready(combined_nn(x, params))
    ref = jax.block_until_ready(reference(x, params))

    assert out.shape == (N, D_OUT)
    # bf16 matmul operands + affine folding introduce small drift vs. the f32 reference.
    assert jnp.max(jnp.abs(out - ref)) < 2e-2

    print("KERNEL_OK")
</pallas_src>

<mosaic_0001>
module attributes {stable_mosaic.version = 11 : i64} {
  func.func @combined_kernel(%arg0: i32, %arg1: memref<2x1024xf32, #tpu.memory_space<vmem>>, %arg2: memref<1024x64xbf16, #tpu.memory_space<vmem>>, %arg3: memref<1x64xf32, #tpu.memory_space<vmem>>, %arg4: memref<64x8xbf16, #tpu.memory_space<vmem>>, %arg5: memref<1x8xf32, #tpu.memory_space<vmem>>, %arg6: memref<2x8xf32, #tpu.memory_space<vmem>>) attributes {dimension_semantics = [#tpu.dimension_semantics<parallel>], iteration_bounds = array<i64: 1>, scalar_prefetch = 0 : i64, scratch_operands = 0 : i64, tpu.core_type = #tpu.core_type<tc>, window_params = [{transform_indices = @transform_0, window_bounds = array<i64: 2, 1024>}, {pipeline_mode = #tpu.pipeline_mode<synchronous>, transform_indices = @transform_1, window_bounds = array<i64: 1024, 64>}, {pipeline_mode = #tpu.pipeline_mode<synchronous>, transform_indices = @transform_2, window_bounds = array<i64: 1, 64>}, {pipeline_mode = #tpu.pipeline_mode<synchronous>, transform_indices = @transform_3, window_bounds = array<i64: 64, 8>}, {pipeline_mode = #tpu.pipeline_mode<synchronous>, transform_indices = @transform_4, window_bounds = array<i64: 1, 8>}, {transform_indices = @transform_5, window_bounds = array<i64: 2, 8>}]} {
    %c0 = arith.constant 0 : index
    %c0_0 = arith.constant 0 : index
    %0 = vector.load %arg1[%c0, %c0_0] : memref<2x1024xf32, #tpu.memory_space<vmem>>, vector<2x1024xf32>
    %1 = arith.truncf %0 : vector<2x1024xf32> to vector<2x1024xbf16>
    %c0_1 = arith.constant 0 : index
    %c0_2 = arith.constant 0 : index
    %2 = vector.load %arg2[%c0_1, %c0_2] : memref<1024x64xbf16, #tpu.memory_space<vmem>>, vector<1024x64xbf16>
    %cst = arith.constant dense<0.000000e+00> : vector<2x64xf32>
    %3 = tpu.matmul %1, %2, %cst {dimension_numbers = #tpu.dot_dimension_numbers<[1], [0], [0], [1], [0, 0, 1, 1], [], []>} : vector<2x1024xbf16>, vector<1024x64xbf16>, vector<2x64xf32> -> vector<2x64xf32>
    %c0_3 = arith.constant 0 : index
    %c0_4 = arith.constant 0 : index
    %4 = vector.load %arg3[%c0_3, %c0_4] : memref<1x64xf32, #tpu.memory_space<vmem>>, vector<1x64xf32>
    %5 = vector.broadcast %4 : vector<1x64xf32> to vector<2x64xf32>
    %6 = arith.addf %3, %5 : vector<2x64xf32>
    %cst_5 = arith.constant 0.000000e+00 : f32
    %7 = vector.broadcast %cst_5 : f32 to vector<2x64xf32>
    %8 = arith.maximumf %6, %7 : vector<2x64xf32>
    %9 = arith.truncf %8 : vector<2x64xf32> to vector<2x64xbf16>
    %c0_6 = arith.constant 0 : index
    %c0_7 = arith.constant 0 : index
    %10 = vector.load %arg4[%c0_6, %c0_7] : memref<64x8xbf16, #tpu.memory_space<vmem>>, vector<64x8xbf16>
    %cst_8 = arith.constant dense<0.000000e+00> : vector<2x8xf32>
    %11 = tpu.matmul %9, %10, %cst_8 {dimension_numbers = #tpu.dot_dimension_numbers<[1], [0], [0], [1], [0, 0, 1, 1], [], []>} : vector<2x64xbf16>, vector<64x8xbf16>, vector<2x8xf32> -> vector<2x8xf32>
    %c0_9 = arith.constant 0 : index
    %c0_10 = arith.constant 0 : index
    %12 = vector.load %arg5[%c0_9, %c0_10] : memref<1x8xf32, #tpu.memory_space<vmem>>, vector<1x8xf32>
    %13 = vector.broadcast %12 : vector<1x8xf32> to vector<2x8xf32>
    %14 = arith.addf %11, %13 : vector<2x8xf32>
    %c0_11 = arith.constant 0 : index
    %c0_12 = arith.constant 0 : index
    %15 = vector.load %arg6[%c0_11, %c0_12] : memref<2x8xf32, #tpu.memory_space<vmem>>, vector<2x8xf32>
    tpu.vector_store %arg6[%c0_11, %c0_12], %14 {strides = array<i32>} : memref<2x8xf32, #tpu.memory_space<vmem>>, vector<2x8xf32>,
    return
  }
  func.func @transform_0(%arg0: i32) -> (i32, i32) {
    %c0_i32 = arith.constant 0 : i32
    %c0_i32_0 = arith.constant 0 : i32
    return %arg0, %c0_i32 : i32, i32
  }
  func.func @transform_1(%arg0: i32) -> (i32, i32) {
    %c0_i32 = arith.constant 0 : i32
    %c0_i32_0 = arith.constant 0 : i32
    %c0_i32_1 = arith.constant 0 : i32
    return %c0_i32, %c0_i32_0 : i32, i32
  }
  func.func @transform_2(%arg0: i32) -> (i32, i32) {
    %c0_i32 = arith.constant 0 : i32
    %c0_i32_0 = arith.constant 0 : i32
    %c0_i32_1 = arith.constant 0 : i32
    return %c0_i32, %c0_i32_0 : i32, i32
  }
  func.func @transform_3(%arg0: i32) -> (i32, i32) {
    %c0_i32 = arith.constant 0 : i32
    %c0_i32_0 = arith.constant 0 : i32
    %c0_i32_1 = arith.constant 0 : i32
    return %c0_i32, %c0_i32_0 : i32, i32
  }
  func.func @transform_4(%arg0: i32) -> (i32, i32) {
    %c0_i32 = arith.constant 0 : i32
    %c0_i32_0 = arith.constant 0 : i32
    %c0_i32_1 = arith.constant 0 : i32
    return %c0_i32, %c0_i32_0 : i32, i32
  }
  func.func @transform_5(%arg0: i32) -> (i32, i32) {
    %c0_i32 = arith.constant 0 : i32
    %c0_i32_0 = arith.constant 0 : i32
    return %arg0, %c0_i32 : i32, i32
  }
}

</mosaic_0001>

<llo_original>
// kernel: tpu_custom_call.1
$region0: #{tpu_custom_call.1}
  #allocation0 [shape = 'u32[]', space=smem, size = 0x4, offset = 0x4, fixed_abs, tag = 'smem constant byte address 0x4 - core index']
  #allocation1 [shape = 'u32[144,128]{1,0:T(1,128)}', space=vmem, size = 0x12000, scoped, tag = 'internal scratch']
  %s0 = inlined_call_operand.vmem [shape: f32[2,1024], index: 0, kind: input, shape index: {}]
  %s1 = inlined_call_operand.vmem [shape: bf16[1024,64], index: 1, kind: input, shape index: {}]
  %s2 = inlined_call_operand.vmem [shape: f32[1,64], index: 2, kind: input, shape index: {}]
  %s3 = inlined_call_operand.vmem [shape: bf16[64,8], index: 3, kind: input, shape index: {}]
  %s4 = inlined_call_operand.vmem [shape: f32[1,8], index: 4, kind: input, shape index: {}]
  %s5 = inlined_call_operand.hbm [shape: f32[2,8], index: 5, kind: output, shape index: {}]
  %s6 = sld [smem:[#allocation0]]
  $region30: #{tpu_custom_call.1} parent=0
    _
  %s8 = ssub.s32 1, %s6
  %s9 = scalar_select 0, %s8, %s6
  $region1: #{tpu_custom_call.1} parent=0
    #allocation2 [shape = 'u8[1024]{0}', space=vmem, size = 0x400, scoped, tag = 'output window, operand 0, single buffered']
    #allocation3 [shape = 's32[1]{0}', space=sflag, size = 0x4, scoped, tag = 'scoped memory for tpu_custom_call.1']
    %10 = vsyncpa [#allocation3], 0
    // Predicated region
    $region2: #{tpu_custom_call.1} parent=1 // pred_check
      _
    $region3: #{tpu_custom_call.1} parent=1 // pred_check_branch
      %12 = sbr.rel (0) target = $region5
    $region4: #{tpu_custom_call.1} parent=1 // pred_region
      _
    $region5: #{tpu_custom_call.1} parent=1 // pred_fallthru
      _
    // Predicated region
    $region6: #{tpu_custom_call.1} parent=1 // pred_check
      _
    $region7: #{tpu_custom_call.1} parent=1 // pred_check_branch
      %14 = sbr.rel (0) target = $region9
    $region8: #{tpu_custom_call.1} parent=1 // pred_region
      _
    $region9: #{tpu_custom_call.1} parent=1 // pred_fallthru
      _
    // Predicated region
    $region10: #{tpu_custom_call.1} parent=1 // pred_check
      _
    $region11: #{tpu_custom_call.1} parent=1 // pred_check_branch
      %16 = sbr.rel (0) target = $region13
    $region12: #{tpu_custom_call.1} parent=1 // pred_region
      _
    $region13: #{tpu_custom_call.1} parent=1 // pred_fallthru
      _
    // Predicated region
    $region14: #{tpu_custom_call.1} parent=1 // pred_check
      _
    $region15: #{tpu_custom_call.1} parent=1 // pred_check_branch
      %18 = sbr.rel (0) target = $region17
    $region16: #{tpu_custom_call.1} parent=1 // pred_region
      _
    $region17: #{tpu_custom_call.1} parent=1 // pred_fallthru
      _
    // Predicated region
    $region18: #{tpu_custom_call.1} parent=1 // pred_check
      _
    $region19: #{tpu_custom_call.1} parent=1 // pred_check_branch
      %20 = sbr.rel (0) target = $region21
    $region20: #{tpu_custom_call.1} parent=1 // pred_region
      _
    $region21: #{tpu_custom_call.1} parent=1 // pred_fallthru
      _
    %v22 = vld [vmem:[%s0] sm:$0xff]
    %v23 = vld [vmem:[%s0 + $0x8] sm:$0xff]
    %v26 = vcombine.high %v22, %v22
    %v28 = vunpack.c.l.s4 1983009808
    %v29 = vunpack.c.0.s8 %v28
    %v30 = vlaneseq
    %v31 = vshrl.u32 %v30, 7
    %v32 = vsub.s32 %v29, %v31
    %v33 = vrot.slane %v22, %v32
    %v35 = vunpack.c.l.s4 1983009808
    %v36 = vunpack.c.0.s8 %v35
    %v37 = vlaneseq
    %v38 = vshrl.u32 %v37, 7
    %v39 = vsub.s32 %v36, %v38
    %v40 = vrot.slane %v26, %v39
    %v41 = vcombine.high %v33, %v33
    %v42 = vcombine.high %v40, %v40
    %v43 = vcombine.high %v23, %v23
    %v45 = vunpack.c.l.s4 1983009808
    %v46 = vunpack.c.0.s8 %v45
    %v47 = vlaneseq
    %v48 = vshrl.u32 %v47, 7
    %v49 = vsub.s32 %v46, %v48
    %v50 = vrot.slane %v23, %v49
    %v52 = vunpack.c.l.s4 1983009808
    %v53 = vunpack.c.0.s8 %v52
    %v54 = vlaneseq
    %v55 = vshrl.u32 %v54, 7
    %v56 = vsub.s32 %v53, %v55
    %v57 = vrot.slane %v43, %v56
    %v58 = vcombine.high %v50, %v50
    %v59 = vcombine.high %v57, %v57
    %v68 = vpack.c.bf16 %v33, %v33
    %v69 = vpack.c.bf16 %v41, %v41
    %v70 = vpack.c.bf16 %v40, %v40
    %v71 = vpack.c.bf16 %v42, %v42
    %v72 = vpack.c.bf16 %v50, %v50
    %v73 = vpack.c.bf16 %v58, %v58
    %v74 = vpack.c.bf16 %v57, %v57
    %v75 = vpack.c.bf16 %v59, %v59
    %v76 = vld [vmem:[%s1] sm:$0xf]
    %v77 = vld [vmem:[%s1 + $0x4] sm:$0xf]
    %v78 = vld [vmem:[%s1 + $0x8] sm:$0xf]
    %v79 = vld [vmem:[%s1 + $0xc] sm:$0xf]
    %v80 = vld [vmem:[%s1 + $0x10] sm:$0xf]
    %v81 = vld [vmem:[%s1 + $0x14] sm:$0xf]
    %v82 = vld [vmem:[%s1 + $0x18] sm:$0xf]
    %v83 = vld [vmem:[%s1 + $0x1c] sm:$0xf]
    %v84 = vld [vmem:[%s1 + $0x20] sm:$0xf]
    %v85 = vld [vmem:[%s1 + $0x24] sm:$0xf]
    %v86 = vld [vmem:[%s1 + $0x28] sm:$0xf]
    %v87 = vld [vmem:[%s1 + $0x2c] sm:$0xf]
    %v88 = vld [vmem:[%s1 + $0x30] sm:$0xf]
    %v89 = vld [vmem:[%s1 + $0x34] sm:$0xf]
    %v90 = vld [vmem:[%s1 + $0x38] sm:$0xf]
    %v91 = vld [vmem:[%s1 + $0x3c] sm:$0xf]
    %v92 = vld [vmem:[%s1 + $0x40] sm:$0xf]
    %v93 = vld [vmem:[%s1 + $0x44] sm:$0xf]
    %v94 = vld [vmem:[%s1 + $0x48] sm:$0xf]
    %v95 = vld [vmem:[%s1 + $0x4c] sm:$0xf]
    %v96 = vld [vmem:[%s1 + $0x50] sm:$0xf]
    %v97 = vld [vmem:[%s1 + $0x54] sm:$0xf]
    %v98 = vld [vmem:[%s1 + $0x58] sm:$0xf]
    %v99 = vld [vmem:[%s1 + $0x5c] sm:$0xf]
    %v100 = vld [vmem:[%s1 + $0x60] sm:$0xf]
    %v101 = vld [vmem:[%s1 + $0x64] sm:$0xf]
    %v102 = vld [vmem:[%s1 + $0x68] sm:$0xf]
    %v103 = vld [vmem:[%s1 + $0x6c] sm:$0xf]
    %v104 = vld [vmem:[%s1 + $0x70] sm:$0xf]
    %v105 = vld [vmem:[%s1 + $0x74] sm:$0xf]
    %v106 = vld [vmem:[%s1 + $0x78] sm:$0xf]
    %v107 = vld [vmem:[%s1 + $0x7c] sm:$0xf]
    %v108 = vld [vmem:[%s1 + $0x80] sm:$0xf]
    %v109 = vld [vmem:[%s1 + $0x84] sm:$0xf]
    %v110 = vld [vmem:[%s1 + $0x88] sm:$0xf]
    %v111 = vld [vmem:[%s1 + $0x8c] sm:$0xf]
    %v112 = vld [vmem:[%s1 + $0x90] sm:$0xf]
    %v113 = vld [vmem:[%s1 + $0x94] sm:$0xf]
    %v114 = vld [vmem:[%s1 + $0x98] sm:$0xf]
    %v115 = vld [vmem:[%s1 + $0x9c] sm:$0xf]
    %v116 = vld [vmem:[%s1 + $0xa0] sm:$0xf]
    %v117 = vld [vmem:[%s1 + $0xa4] sm:$0xf]
    %v118 = vld [vmem:[%s1 + $0xa8] sm:$0xf]
    %v119 = vld [vmem:[%s1 + $0xac] sm:$0xf]
    %v120 = vld [vmem:[%s1 + $0xb0] sm:$0xf]
    %v121 = vld [vmem:[%s1 + $0xb4] sm:$0xf]
    %v122 = vld [vmem:[%s1 + $0xb8] sm:$0xf]
    %v123 = vld [vmem:[%s1 + $0xbc] sm:$0xf]
    %v124 = vld [vmem:[%s1 + $0xc0] sm:$0xf]
    %v125 = vld [vmem:[%s1 + $0xc4] sm:$0xf]
    %v126 = vld [vmem:[%s1 + $0xc8] sm:$0xf]
    %v127 = vld [vmem:[%s1 + $0xcc] sm:$0xf]
    %v128 = vld [vmem:[%s1 + $0xd0] sm:$0xf]
    %v129 = vld [vmem:[%s1 + $0xd4] sm:$0xf]
    %v130 = vld [vmem:[%s1 + $0xd8] sm:$0xf]
    %v131 = vld [vmem:[%s1 + $0xdc] sm:$0xf]
    %v132 = vld [vmem:[%s1 + $0xe0] sm:$0xf]
    %v133 = vld [vmem:[%s1 + $0xe4] sm:$0xf]
    %v134 = vld [vmem:[%s1 + $0xe8] sm:$0xf]
    %v135 = vld [vmem:[%s1 + $0xec] sm:$0xf]
    %v136 = vld [vmem:[%s1 + $0xf0] sm:$0xf]
    %v137 = vld [vmem:[%s1 + $0xf4] sm:$0xf]
    %v138 = vld [vmem:[%s1 + $0xf8] sm:$0xf]
    %v139 = vld [vmem:[%s1 + $0xfc] sm:$0xf]
    %v140 = vld [vmem:[%s1 + $0x100] sm:$0xf]
    %v141 = vld [vmem:[%s1 + $0x104] sm:$0xf]
    %v142 = vld [vmem:[%s1 + $0x108] sm:$0xf]
    %v143 = vld [vmem:[%s1 + $0x10c] sm:$0xf]
    %v144 = vld [vmem:[%s1 + $0x110] sm:$0xf]
    %v145 = vld [vmem:[%s1 + $0x114] sm:$0xf]
    %v146 = vld [vmem:[%s1 + $0x118] sm:$0xf]
    %v147 = vld [vmem:[%s1 + $0x11c] sm:$0xf]
    %v148 = vld [vmem:[%s1 + $0x120] sm:$0xf]
    %v149 = vld [vmem:[%s1 + $0x124] sm:$0xf]
    %v150 = vld [vmem:[%s1 + $0x128] sm:$0xf]
    %v151 = vld [vmem:[%s1 + $0x12c] sm:$0xf]
    %v152 = vld [vmem:[%s1 + $0x130] sm:$0xf]
    %v153 = vld [vmem:[%s1 + $0x134] sm:$0xf]
    %v154 = vld [vmem:[%s1 + $0x138] sm:$0xf]
    %v155 = vld [vmem:[%s1 + $0x13c] sm:$0xf]
    %v156 = vld [vmem:[%s1 + $0x140] sm:$0xf]
    %v157 = vld [vmem:[%s1 + $0x144] sm:$0xf]
    %v158 = vld [vmem:[%s1 + $0x148] sm:$0xf]
    %v159 = vld [vmem:[%s1 + $0x14c] sm:$0xf]
    %v160 = vld [vmem:[%s1 + $0x150] sm:$0xf]
    %v161 = vld [vmem:[%s1 + $0x154] sm:$0xf]
    %v162 = vld [vmem:[%s1 + $0x158] sm:$0xf]
    %v163 = vld [vmem:[%s1 + $0x15c] sm:$0xf]
    %v164 = vld [vmem:[%s1 + $0x160] sm:$0xf]
    %v165 = vld [vmem:[%s1 + $0x164] sm:$0xf]
    %v166 = vld [vmem:[%s1 + $0x168] sm:$0xf]
    %v167 = vld [vmem:[%s1 + $0x16c] sm:$0xf]
    %v168 = vld [vmem:[%s1 + $0x170] sm:$0xf]
    %v169 = vld [vmem:[%s1 + $0x174] sm:$0xf]
    %v170 = vld [vmem:[%s1 + $0x178] sm:$0xf]
    %v171 = vld [vmem:[%s1 + $0x17c] sm:$0xf]
    %v172 = vld [vmem:[%s1 + $0x180] sm:$0xf]
    %v173 = vld [vmem:[%s1 + $0x184] sm:$0xf]
    %v174 = vld [vmem:[%s1 + $0x188] sm:$0xf]
    %v175 = vld [vmem:[%s1 + $0x18c] sm:$0xf]
    %v176 = vld [vmem:[%s1 + $0x190] sm:$0xf]
    %v177 = vld [vmem:[%s1 + $0x194] sm:$0xf]
    %v178 = vld [vmem:[%s1 + $0x198] sm:$0xf]
    %v179 = vld [vmem:[%s1 + $0x19c] sm:$0xf]
    %v180 = vld [vmem:[%s1 + $0x1a0] sm:$0xf]
    %v181 = vld [vmem:[%s1 + $0x1a4] sm:$0xf]
    %v182 = vld [vmem:[%s1 + $0x1a8] sm:$0xf]
    %v183 = vld [vmem:[%s1 + $0x1ac] sm:$0xf]
    %v184 = vld [vmem:[%s1 + $0x1b0] sm:$0xf]
    %v185 = vld [vmem:[%s1 + $0x1b4] sm:$0xf]
    %v186 = vld [vmem:[%s1 + $0x1b8] sm:$0xf]
    %v187 = vld [vmem:[%s1 + $0x1bc] sm:$0xf]
    %v188 = vld [vmem:[%s1 + $0x1c0] sm:$0xf]
    %v189 = vld [vmem:[%s1 + $0x1c4] sm:$0xf]
    %v190 = vld [vmem:[%s1 + $0x1c8] sm:$0xf]
    %v191 = vld [vmem:[%s1 + $0x1cc] sm:$0xf]
    %v192 = vld [vmem:[%s1 + $0x1d0] sm:$0xf]
    %v193 = vld [vmem:[%s1 + $0x1d4] sm:$0xf]
    %v194 = vld [vmem:[%s1 + $0x1d8] sm:$0xf]
    %v195 = vld [vmem:[%s1 + $0x1dc] sm:$0xf]
    %v196 = vld [vmem:[%s1 + $0x1e0] sm:$0xf]
    %v197 = vld [vmem:[%s1 + $0x1e4] sm:$0xf]
    %v198 = vld [vmem:[%s1 + $0x1e8] sm:$0xf]
    %v199 = vld [vmem:[%s1 + $0x1ec] sm:$0xf]
    %v200 = vld [vmem:[%s1 + $0x1f0] sm:$0xf]
    %v201 = vld [vmem:[%s1 + $0x1f4] sm:$0xf]
    %v202 = vld [vmem:[%s1 + $0x1f8] sm:$0xf]
    %v203 = vld [vmem:[%s1 + $0x1fc] sm:$0xf]
    %v204 = vld [vmem:[%s2] sm:$0x1]
    %v206 = vlaneseq
    %v207 = vshrl.u32 %v206, 7
    %v208 = vsub.s32 0, %v207
    %v209 = vrot.slane %v204, %v208
    %v339 = vunpack.c.l.b16 %v76
    %v340 = vunpack.c.l.b16 %v77
    %v341 = vunpack.c.l.b16 %v78
    %v342 = vunpack.c.l.b16 %v79
    %v343 = vunpack.c.l.b16 %v80
    %v344 = vunpack.c.l.b16 %v81
    %v345 = vunpack.c.l.b16 %v82
    %v346 = vunpack.c.l.b16 %v83
    %v347 = vunpack.c.l.b16 %v84
    %v348 = vunpack.c.l.b16 %v85
    %v349 = vunpack.c.l.b16 %v86
    %v350 = vunpack.c.l.b16 %v87
    %v351 = vunpack.c.l.b16 %v88
    %v352 = vunpack.c.l.b16 %v89
    %v353 = vunpack.c.l.b16 %v90
    %v354 = vunpack.c.l.b16 %v91
    %v355 = vunpack.c.l.b16 %v92
    %v356 = vunpack.c.l.b16 %v93
    %v357 = vunpack.c.l.b16 %v94
    %v358 = vunpack.c.l.b16 %v95
    %v359 = vunpack.c.l.b16 %v96
    %v360 = vunpack.c.l.b16 %v97
    %v361 = vunpack.c.l.b16 %v98
    %v362 = vunpack.c.l.b16 %v99
    %v363 = vunpack.c.l.b16 %v100
    %v364 = vunpack.c.l.b16 %v101
    %v365 = vunpack.c.l.b16 %v102
    %v366 = vunpack.c.l.b16 %v103
    %v367 = vunpack.c.l.b16 %v104
    %v368 = vunpack.c.l.b16 %v105
    %v369 = vunpack.c.l.b16 %v106
    %v370 = vunpack.c.l.b16 %v107
    %v371 = vunpack.c.l.b16 %v108
    %v372 = vunpack.c.l.b16 %v109
    %v373 = vunpack.c.l.b16 %v110
    %v374 = vunpack.c.l.b16 %v111
    %v375 = vunpack.c.l.b16 %v112
    %v376 = vunpack.c.l.b16 %v113
    %v377 = vunpack.c.l.b16 %v114
    %v378 = vunpack.c.l.b16 %v115
    %v379 = vunpack.c.l.b16 %v116
    %v380 = vunpack.c.l.b16 %v117
    %v381 = vunpack.c.l.b16 %v118
    %v382 = vunpack.c.l.b16 %v119
    %v383 = vunpack.c.l.b16 %v120
    %v384 = vunpack.c.l.b16 %v121
    %v385 = vunpack.c.l.b16 %v122
    %v386 = vunpack.c.l.b16 %v123
    %v387 = vunpack.c.l.b16 %v124
    %v388 = vunpack.c.l.b16 %v125
    %v389 = vunpack.c.l.b16 %v126
    %v390 = vunpack.c.l.b16 %v127
    %v391 = vunpack.c.l.b16 %v128
    %v392 = vunpack.c.l.b16 %v129
    %v393 = vunpack.c.l.b16 %v130
    %v394 = vunpack.c.l.b16 %v131
    %v395 = vunpack.c.l.b16 %v132
    %v396 = vunpack.c.l.b16 %v133
    %v397 = vunpack.c.l.b16 %v134
    %v398 = vunpack.c.l.b16 %v135
    %v399 = vunpack.c.l.b16 %v136
    %v400 = vunpack.c.l.b16 %v137
    %v401 = vunpack.c.l.b16 %v138
    %v402 = vunpack.c.l.b16 %v139
    %v403 = vunpack.c.l.b16 %v140
    %v404 = vunpack.c.l.b16 %v141
    %v405 = vunpack.c.l.b16 %v142
    %v406 = vunpack.c.l.b16 %v143
    %v407 = vunpack.c.l.b16 %v144
    %v408 = vunpack.c.l.b16 %v145
    %v409 = vunpack.c.l.b16 %v146
    %v410 = vunpack.c.l.b16 %v147
    %v411 = vunpack.c.l.b16 %v148
    %v412 = vunpack.c.l.b16 %v149
    %v413 = vunpack.c.l.b16 %v150
    %v414 = vunpack.c.l.b16 %v151
    %v415 = vunpack.c.l.b16 %v152
    %v416 = vunpack.c.l.b16 %v153
    %v417 = vunpack.c.l.b16 %v154
    %v418 = vunpack.c.l.b16 %v155
    %v419 = vunpack.c.l.b16 %v156
    %v420 = vunpack.c.l.b16 %v157
    %v421 = vunpack.c.l.b16 %v158
    %v422 = vunpack.c.l.b16 %v159
    %v423 = vunpack.c.l.b16 %v160
    %v424 = vunpack.c.l.b16 %v161
    %v425 = vunpack.c.l.b16 %v162
    %v426 = vunpack.c.l.b16 %v163
    %v427 = vunpack.c.l.b16 %v164
    %v428 = vunpack.c.l.b16 %v165
    %v429 = vunpack.c.l.b16 %v166
    %v430 = vunpack.c.l.b16 %v167
    %v431 = vunpack.c.l.b16 %v168
    %v432 = vunpack.c.l.b16 %v169
    %v433 = vunpack.c.l.b16 %v170
    %v434 = vunpack.c.l.b16 %v171
    %v435 = vunpack.c.l.b16 %v172
    %v436 = vunpack.c.l.b16 %v173
    %v437 = vunpack.c.l.b16 %v174
    %v438 = vunpack.c.l.b16 %v175
    %v439 = vunpack.c.l.b16 %v176
    %v440 = vunpack.c.l.b16 %v177
    %v441 = vunpack.c.l.b16 %v178
    %v442 = vunpack.c.l.b16 %v179
    %v443 = vunpack.c.l.b16 %v180
    %v444 = vunpack.c.l.b16 %v181
    %v445 = vunpack.c.l.b16 %v182
    %v446 = vunpack.c.l.b16 %v183
    %v447 = vunpack.c.l.b16 %v184
    %v448 = vunpack.c.l.b16 %v185
    %v449 = vunpack.c.l.b16 %v186
    %v450 = vunpack.c.l.b16 %v187
    %v451 = vunpack.c.l.b16 %v188
    %v452 = vunpack.c.l.b16 %v189
    %v453 = vunpack.c.l.b16 %v190
    %v454 = vunpack.c.l.b16 %v191
    %v455 = vunpack.c.l.b16 %v192
    %v456 = vunpack.c.l.b16 %v193
    %v457 = vunpack.c.l.b16 %v194
    %v458 = vunpack.c.l.b16 %v195
    %v459 = vunpack.c.l.b16 %v196
    %v460 = vunpack.c.l.b16 %v197
    %v461 = vunpack.c.l.b16 %v198
    %v462 = vunpack.c.l.b16 %v199
    %v463 = vunpack.c.l.b16 %v200
    %v464 = vunpack.c.l.b16 %v201
    %v465 = vunpack.c.l.b16 %v202
    %v466 = vunpack.c.l.b16 %v203
    %v467 = vpack.c.b16 %v340, %v339
    %v468 = vpack.c.b16 %v342, %v341
    %v469 = vpack.c.b16 %v344, %v343
    %v470 = vpack.c.b16 %v346, %v345
    %v471 = vpack.c.b16 %v348, %v347
    %v472 = vpack.c.b16 %v350, %v349
    %v473 = vpack.c.b16 %v352, %v351
    %v474 = vpack.c.b16 %v354, %v353
    %v475 = vpack.c.b16 %v356, %v355
    %v476 = vpack.c.b16 %v358, %v357
    %v477 = vpack.c.b16 %v360, %v359
    %v478 = vpack.c.b16 %v362, %v361
    %v479 = vpack.c.b16 %v364, %v363
    %v480 = vpack.c.b16 %v366, %v365
    %v481 = vpack.c.b16 %v368, %v367
    %v482 = vpack.c.b16 %v370, %v369
    %v483 = vpack.c.b16 %v372, %v371
    %v484 = vpack.c.b16 %v374, %v373
    %v485 = vpack.c.b16 %v376, %v375
    %v486 = vpack.c.b16 %v378, %v377
    %v487 = vpack.c.b16 %v380, %v379
    %v488 = vpack.c.b16 %v382, %v381
    %v489 = vpack.c.b16 %v384, %v383
    %v490 = vpack.c.b16 %v386, %v385
    %v491 = vpack.c.b16 %v388, %v387
    %v492 = vpack.c.b16 %v390, %v389
    %v493 = vpack.c.b16 %v392, %v391
    %v494 = vpack.c.b16 %v394, %v393
    %v495 = vpack.c.b16 %v396, %v395
    %v496 = vpack.c.b16 %v398, %v397
    %v497 = vpack.c.b16 %v400, %v399
    %v498 = vpack.c.b16 %v402, %v401
    %v499 = vpack.c.b16 %v404, %v403
    %v500 = vpack.c.b16 %v406, %v405
    %v501 = vpack.c.b16 %v408, %v407
    %v502 = vpack.c.b16 %v410, %v409
    %v503 = vpack.c.b16 %v412, %v411
    %v504 = vpack.c.b16 %v414, %v413
    %v505 = vpack.c.b16 %v416, %v415
    %v506 = vpack.c.b16 %v418, %v417
    %v507 = vpack.c.b16 %v420, %v419
    %v508 = vpack.c.b16 %v422, %v421
    %v509 = vpack.c.b16 %v424, %v423
    %v510 = vpack.c.b16 %v426, %v425
    %v511 = vpack.c.b16 %v428, %v427
    %v512 = vpack.c.b16 %v430, %v429
    %v513 = vpack.c.b16 %v432, %v431
    %v514 = vpack.c.b16 %v434, %v433
    %v515 = vpack.c.b16 %v436, %v435
    %v516 = vpack.c.b16 %v438, %v437
    %v517 = vpack.c.b16 %v440, %v439
    %v518 = vpack.c.b16 %v442, %v441
    %v519 = vpack.c.b16 %v444, %v443
    %v520 = vpack.c.b16 %v446, %v445
    %v521 = vpack.c.b16 %v448, %v447
    %v522 = vpack.c.b16 %v450, %v449
    %v523 = vpack.c.b16 %v452, %v451
    %v524 = vpack.c.b16 %v454, %v453
    %v525 = vpack.c.b16 %v456, %v455
    %v526 = vpack.c.b16 %v458, %v457
    %v527 = vpack.c.b16 %v460, %v459
    %v528 = vpack.c.b16 %v462, %v461
    %v529 = vpack.c.b16 %v464, %v463
    %v530 = vpack.c.b16 %v466, %v465
    %595 = vmatprep.subr.bf16.mxu0 0
    %596 = vmatpush1.bf16.msra.mxu0 %v474
    %597 = vmatprep.subr.bf16.mxu0 0
    %598 = vmatpush1.bf16.msra.mxu0 %v473
    %599 = vmatprep.subr.bf16.mxu0 0
    %600 = vmatpush1.bf16.msra.mxu0 %v472
    %601 = vmatprep.subr.bf16.mxu0 0
    %602 = vmatpush1.bf16.msra.mxu0 %v471
    %603 = vmatprep.subr.bf16.mxu0 0
    %604 = vmatpush1.bf16.msra.mxu0 %v470
    %605 = vmatprep.subr.bf16.mxu0 0
    %606 = vmatpush1.bf16.msra.mxu0 %v469
    %607 = vmatprep.subr.bf16.mxu0 0
    %608 = vmatpush1.bf16.msra.mxu0 %v468
    %609 = vmatprep.subr.bf16.mxu0 0
    %610 = vmatpush1.bf16.msra.mxu0 %v467
    %611 = vmatprep.subr.bf16.mxu0 0
    %612 = vmatpush2.bf16.msra.mxu0 %v482
    %613 = vmatprep.subr.bf16.mxu0 0
    %614 = vmatpush2.bf16.msra.mxu0 %v481
    %615 = vmatprep.subr.bf16.mxu0 0
    %616 = vmatpush2.bf16.msra.mxu0 %v480
    %617 = vmatprep.subr.bf16.mxu0 0
    %618 = vmatpush2.bf16.msra.mxu0 %v479
    %619 = vmatprep.subr.bf16.mxu0 0
    %620 = vmatpush2.bf16.msra.mxu0 %v478
    %621 = vmatprep.subr.bf16.mxu0 0
    %622 = vmatpush2.bf16.msra.mxu0 %v477
    %623 = vmatprep.subr.bf16.mxu0 0
    %624 = vmatpush2.bf16.msra.mxu0 %v476
    %625 = vmatprep.subr.bf16.mxu0 0
    %626 = vmatpush2.bf16.msra.mxu0 %v475
    %627 = vmatprep.mubr.bf16.mxu0 %v69
    %628 = vmatmul.mubr.bf16.gmra.mxu0 %v68
    %v629 = vpop.f32.mrf.mxu0
    %v630 = vadd.f32 %v209, %v629
    %v631 = vpop.f32.mrf.mxu0
    %v632 = vpop.f32.mrf.mxu0
    %v633 = vpop.f32.mrf.mxu0
    %634 = vdwg.mxu0
    %635 = vmatprep.subr.bf16.mxu0 0
    %636 = vmatpush1.bf16.msra.mxu0 %v490
    %637 = vmatprep.subr.bf16.mxu0 0
    %638 = vmatpush1.bf16.msra.mxu0 %v489
    %639 = vmatprep.subr.bf16.mxu0 0
    %640 = vmatpush1.bf16.msra.mxu0 %v488
    %641 = vmatprep.subr.bf16.mxu0 0
    %642 = vmatpush1.bf16.msra.mxu0 %v487
    %643 = vmatprep.subr.bf16.mxu0 0
    %644 = vmatpush1.bf16.msra.mxu0 %v486
    %645 = vmatprep.subr.bf16.mxu0 0
    %646 = vmatpush1.bf16.msra.mxu0 %v485
    %647 = vmatprep.subr.bf16.mxu0 0
    %648 = vmatpush1.bf16.msra.mxu0 %v484
    %649 = vmatprep.subr.bf16.mxu0 0
    %650 = vmatpush1.bf16.msra.mxu0 %v483
    %651 = vmatprep.subr.bf16.mxu0 0
    %652 = vmatpush2.bf16.msra.mxu0 %v498
    %653 = vmatprep.subr.bf16.mxu0 0
    %654 = vmatpush2.bf16.msra.mxu0 %v497
    %655 = vmatprep.subr.bf16.mxu0 0
    %656 = vmatpush2.bf16.msra.mxu0 %v496
    %657 = vmatprep.subr.bf16.mxu0 0
    %658 = vmatpush2.bf16.msra.mxu0 %v495
    %659 = vmatprep.subr.bf16.mxu0 0
    %660 = vmatpush2.bf16.msra.mxu0 %v494
    %661 = vmatprep.subr.bf16.mxu0 0
    %662 = vmatpush2.bf16.msra.mxu0 %v493
    %663 = vmatprep.subr.bf16.mxu0 0
    %664 = vmatpush2.bf16.msra.mxu0 %v492
    %665 = vmatprep.subr.bf16.mxu0 0
    %666 = vmatpush2.bf16.msra.mxu0 %v491
    %667 = vmatprep.mubr.bf16.mxu0 %v71
    %668 = vmatmul.mubr.bf16.gmra.mxu0 %v70
    %v669 = vpop.f32.mrf.mxu0
    %v670 = vadd.f32 %v630, %v669
    %v671 = vpop.f32.mrf.mxu0
    %v672 = vpop.f32.mrf.mxu0
    %v673 = vpop.f32.mrf.mxu0
    %674 = vdwg.mxu0
    %675 = vmatprep.subr.bf16.mxu0 0
    %676 = vmatpush1.bf16.msra.mxu0 %v506
    %677 = vmatprep.subr.bf16.mxu0 0
    %678 = vmatpush1.bf16.msra.mxu0 %v505
    %679 = vmatprep.subr.bf16.mxu0 0
    %680 = vmatpush1.bf16.msra.mxu0 %v504
    %681 = vmatprep.subr.bf16.mxu0 0
    %682 = vmatpush1.bf16.msra.mxu0 %v503
    %683 = vmatprep.subr.bf16.mxu0 0
    %684 = vmatpush1.bf16.msra.mxu0 %v502
    %685 = vmatprep.subr.bf16.mxu0 0
    %686 = vmatpush1.bf16.msra.mxu0 %v501
    %687 = vmatprep.subr.bf16.mxu0 0
    %688 = vmatpush1.bf16.msra.mxu0 %v500
    %689 = vmatprep.subr.bf16.mxu0 0
    %690 = vmatpush1.bf16.msra.mxu0 %v499
    %691 = vmatprep.subr.bf16.mxu0 0
    %692 = vmatpush2.bf16.msra.mxu0 %v514
    %693 = vmatprep.subr.bf16.mxu0 0
    %694 = vmatpush2.bf16.msra.mxu0 %v513
    %695 = vmatprep.subr.bf16.mxu0 0
    %696 = vmatpush2.bf16.msra.mxu0 %v512
    %697 = vmatprep.subr.bf16.mxu0 0
    %698 = vmatpush2.bf16.msra.mxu0 %v511
    %699 = vmatprep.subr.bf16.mxu0 0
    %700 = vmatpush2.bf16.msra.mxu0 %v510
    %701 = vmatprep.subr.bf16.mxu0 0
    %702 = vmatpush2.bf16.msra.mxu0 %v509
    %703 = vmatprep.subr.bf16.mxu0 0
    %704 = vmatpush2.bf16.msra.mxu0 %v508
    %705 = vmatprep.subr.bf16.mxu0 0
    %706 = vmatpush2.bf16.msra.mxu0 %v507
    %707 = vmatprep.mubr.bf16.mxu0 %v73
    %708 = vmatmul.mubr.bf16.gmra.mxu0 %v72
    %v709 = vpop.f32.mrf.mxu0
    %v710 = vadd.f32 %v670, %v709
    %v711 = vpop.f32.mrf.mxu0
    %v712 = vpop.f32.mrf.mxu0
    %v713 = vpop.f32.mrf.mxu0
    %714 = vdwg.mxu0
    %715 = vmatprep.subr.bf16.mxu0 0
    %716 = vmatpush1.bf16.msra.mxu0 %v522
    %717 = vmatprep.subr.bf16.mxu0 0
    %718 = vmatpush1.bf16.msra.mxu0 %v521
    %719 = vmatprep.subr.bf16.mxu0 0
    %720 = vmatpush1.bf16.msra.mxu0 %v520
    %721 = vmatprep.subr.bf16.mxu0 0
    %722 = vmatpush1.bf16.msra.mxu0 %v519
    %723 = vmatprep.subr.bf16.mxu0 0
    %724 = vmatpush1.bf16.msra.mxu0 %v518
    %725 = vmatprep.subr.bf16.mxu0 0
    %726 = vmatpush1.bf16.msra.mxu0 %v517
    %727 = vmatprep.subr.bf16.mxu0 0
    %728 = vmatpush1.bf16.msra.mxu0 %v516
    %729 = vmatprep.subr.bf16.mxu0 0
    %730 = vmatpush1.bf16.msra.mxu0 %v515
    %731 = vmatprep.subr.bf16.mxu0 0
    %732 = vmatpush2.bf16.msra.mxu0 %v530
    %733 = vmatprep.subr.bf16.mxu0 0
    %734 = vmatpush2.bf16.msra.mxu0 %v529
    %735 = vmatprep.subr.bf16.mxu0 0
    %736 = vmatpush2.bf16.msra.mxu0 %v528
    %737 = vmatprep.subr.bf16.mxu0 0
    %738 = vmatpush2.bf16.msra.mxu0 %v527
    %739 = vmatprep.subr.bf16.mxu0 0
    %740 = vmatpush2.bf16.msra.mxu0 %v526
    %741 = vmatprep.subr.bf16.mxu0 0
    %742 = vmatpush2.bf16.msra.mxu0 %v525
    %743 = vmatprep.subr.bf16.mxu0 0
    %744 = vmatpush2.bf16.msra.mxu0 %v524
    %745 = vmatprep.subr.bf16.mxu0 0
    %746 = vmatpush2.bf16.msra.mxu0 %v523
    %747 = vmatprep.mubr.bf16.mxu0 %v75
    %748 = vmatmul.mubr.bf16.gmra.mxu0 %v74
    %v749 = vpop.f32.mrf.mxu0
    %v750 = vadd.f32 %v710, %v749
    %v751 = vpop.f32.mrf.mxu0
    %v752 = vpop.f32.mrf.mxu0
    %v753 = vpop.f32.mrf.mxu0
    %754 = vdwg.mxu0
    %v755 = vmax.f32 %v750, 0.0
    %v756 = vpack.c.bf16 %v755, %v755
    %v757 = vld [vmem:[%s3] sm:$0xf]
    %v758 = vld [vmem:[%s3 + $0x4] sm:$0xf]
    %v759 = vld [vmem:[%s3 + $0x8] sm:$0xf]
    %v760 = vld [vmem:[%s3 + $0xc] sm:$0xf]
    %v761 = vld [vmem:[%s3 + $0x10] sm:$0xf]
    %v762 = vld [vmem:[%s3 + $0x14] sm:$0xf]
    %v763 = vld [vmem:[%s3 + $0x18] sm:$0xf]
    %v764 = vld [vmem:[%s3 + $0x1c] sm:$0xf]
    %v765 = vld [vmem:[%s4] sm:$0x1]
    %v767 = vlaneseq
    %v768 = vshrl.u32 %v767, 7
    %v769 = vsub.s32 0, %v768
    %v770 = vrot.slane %v765, %v769
    %v780 = vunpack.c.l.b16 %v757
    %v781 = vunpack.c.l.b16 %v758
    %v782 = vunpack.c.l.b16 %v759
    %v783 = vunpack.c.l.b16 %v760
    %v784 = vunpack.c.l.b16 %v761
    %v785 = vunpack.c.l.b16 %v762
    %v786 = vunpack.c.l.b16 %v763
    %v787 = vunpack.c.l.b16 %v764
    %v788 = vpack.c.b16 %v781, %v780
    %v789 = vpack.c.b16 %v783, %v782
    %v790 = vpack.c.b16 %v785, %v784
    %v791 = vpack.c.b16 %v787, %v786
    %vm796 = vcmask 523264
    %v798 = vsel %vm796, %v756, 0
    %800 = vmatprep.subr.bf16.mxu0 0
    %801 = vmatpush1.bf16.msra.mxu0 0
    %802 = vmatprep.subr.bf16.mxu0 0
    %803 = vmatpush1.bf16.msra.mxu0 0
    %804 = vmatprep.subr.bf16.mxu0 0
    %805 = vmatpush1.bf16.msra.mxu0 0
    %806 = vmatprep.subr.bf16.mxu0 0
    %807 = vmatpush1.bf16.msra.mxu0 0
    %808 = vmatprep.subr.bf16.mxu0 0
    %809 = vmatpush1.bf16.msra.mxu0 %v791
    %810 = vmatprep.subr.bf16.mxu0 0
    %811 = vmatpush1.bf16.msra.mxu0 %v790
    %812 = vmatprep.subr.bf16.mxu0 0
    %813 = vmatpush1.bf16.msra.mxu0 %v789
    %814 = vmatprep.subr.bf16.mxu0 0
    %815 = vmatpush1.bf16.msra.mxu0 %v788
    %816 = vmatprep.subr.bf16.mxu0 0
    %817 = vmatpush2.bf16.msra.mxu0 0
    %818 = vmatprep.subr.bf16.mxu0 0
    %819 = vmatpush2.bf16.msra.mxu0 0
    %820 = vmatprep.subr.bf16.mxu0 0
    %821 = vmatpush2.bf16.msra.mxu0 0
    %822 = vmatprep.subr.bf16.mxu0 0
    %823 = vmatpush2.bf16.msra.mxu0 0
    %824 = vmatprep.subr.bf16.mxu0 0
    %825 = vmatpush2.bf16.msra.mxu0 0
    %826 = vmatprep.subr.bf16.mxu0 0
    %827 = vmatpush2.bf16.msra.mxu0 0
    %828 = vmatprep.subr.bf16.mxu0 0
    %829 = vmatpush2.bf16.msra.mxu0 0
    %830 = vmatprep.subr.bf16.mxu0 0
    %831 = vmatpush2.bf16.msra.mxu0 0
    %832 = vmatprep.mubr.bf16.mxu0 0
    %833 = vmatmul.mubr.bf16.gmra.mxu0 %v798
    %v834 = vpop.f32.mrf.mxu0
    %v835 = vadd.f32 %v770, %v834
    %v836 = vpop.f32.mrf.mxu0
    %v837 = vpop.f32.mrf.mxu0
    %v838 = vpop.f32.mrf.mxu0
    %839 = vdwg.mxu0
    %vm840 = vcmask 58368
    %841 = vst.msk [vmem:[#allocation2] sm:$0x3] %vm840, %v835
    // Predicated region
    $region22: #{tpu_custom_call.1} parent=1 // pred_check
      _
    $region23: #{tpu_custom_call.1} parent=1 // pred_check_branch
      %843 = sbr.rel (0) target = $region25
    $region24: #{tpu_custom_call.1} parent=1 // pred_region
      %s845 = ssub.s32 32, 32
      %846 = vsyncadd [#allocation3], %s845
      %s848 = sshll.u32 [#allocation2], 4
      %s849 = int_to_ptr.vmem [resolvable:$true] %s848
      %851 = dma.vmem_to_hbm [thread:$0]  %s849, 32, %s5, [#allocation3]
    $region25: #{tpu_custom_call.1} parent=1 // pred_fallthru
      _
    // Predicated region
    $region26: #{tpu_custom_call.1} parent=1 // pred_check
      _
    $region27: #{tpu_custom_call.1} parent=1 // pred_check_branch
      %853 = sbr.rel (0) target = $region29
    $region28: #{tpu_custom_call.1} parent=1 // pred_region
      %854 = dma.done [#allocation3], 32
    $region29: #{tpu_custom_call.1} parent=1 // pred_fallthru
      _
    %855 = vsyncpa [#allocation3], 1

</llo_original>
